<compile_context>
chip_gen: v7x
topology: tpu7x:2x2x1
jax: 0.10.0
libtpu: 0.0.40
codegen_flags: <defaults>
</compile_context>

<pallas_src>
import jax
import jax.numpy as jnp
from jax import lax
from jax.experimental import pallas as pl
from jax.experimental.pallas import tpu as pltpu


def _conv_bias_prelu_kernel(x_ref, w_ref, b_ref, alpha_ref, o_ref):
    # x_ref:     (1, Kpad, TM)  bf16   im2col columns for TM output pixels (lane = TM)
    # w_ref:     (Cout, Kpad)   bf16   conv weights as a GEMM matrix
    # b_ref:     (Cout, 1)      f32    conv bias
    # alpha_ref: (1, 1)         f32    shared PReLU slope (SMEM)
    # o_ref:     (1, Cout, TM)  f32    conv+bias+PReLU output (NC(HW), pre-shuffle)
    acc = jnp.dot(w_ref[...], x_ref[0], preferred_element_type=jnp.float32)
    acc = acc + b_ref[...]                       # lane-broadcast of (Cout, 1) bias
    alpha = alpha_ref[0, 0]
    o_ref[0] = jnp.where(acc > 0, acc, alpha * acc).astype(o_ref.dtype)


def upsample_block(x_nchw, weight_oihw, bias, alpha, up_scale):
    """Forward pass of UpsampleBLock. Input/output are NCHW (PyTorch convention)."""
    N, Cin, H, W = x_nchw.shape
    r = up_scale
    Cout = Cin * r * r
    assert weight_oihw.shape == (Cout, Cin, 3, 3)
    HW = H * W
    K = 9 * Cin
    Kpad = ((K + 127) // 128) * 128                       # dense, MXU-aligned K

    # ---- im2col operand (bf16), K zero-padded, spatial axis last (lane-dense) ----
    x_nhwc = jnp.transpose(x_nchw, (0, 2, 3, 1)).astype(jnp.bfloat16)
    x_pad = jnp.pad(x_nhwc, ((0, 0), (1, 1), (1, 1), (0, 0)))      # conv padding=1
    patches = [x_pad[:, kh:kh + H, kw:kw + W, :]
               for kh in range(3) for kw in range(3)]
    cols = jnp.concatenate(patches, axis=-1).reshape(N, HW, K)     # (N, HW, 9*Cin)
    cols = jnp.pad(cols, ((0, 0), (0, 0), (0, Kpad - K)))
    cols = jnp.transpose(cols, (0, 2, 1))                          # (N, Kpad, HW)

    # ---- weights as a (Cout, Kpad) GEMM matrix, same (kh, kw, cin) ordering ----
    w_mat = jnp.transpose(weight_oihw, (0, 2, 3, 1)).reshape(Cout, K)
    w_mat = jnp.pad(w_mat, ((0, 0), (0, Kpad - K))).astype(jnp.bfloat16)

    bias2d = bias.reshape(Cout, 1).astype(jnp.float32)
    alpha2d = jnp.asarray(alpha, jnp.float32).reshape(1, 1)

    # ---- spatial tile: multiple of 128 lanes, sized for VMEM & >=8 pipeline steps ----
    TM = HW
    candidates = [c for c in (2048, 1024, 512, 256, 128) if HW % c == 0]
    for c in candidates:
        if N * (HW // c) >= 8 or c == candidates[-1]:
            TM = c
            break

    conv_flat = pl.pallas_call(
        _conv_bias_prelu_kernel,
        out_shape=jax.ShapeDtypeStruct((N, Cout, HW), x_nchw.dtype),
        grid=(N, HW // TM),
        in_specs=[
            pl.BlockSpec((1, Kpad, TM), lambda n, t: (n, 0, t)),
            pl.BlockSpec((Cout, Kpad), lambda n, t: (0, 0)),
            pl.BlockSpec((Cout, 1), lambda n, t: (0, 0)),
            pl.BlockSpec(memory_space=pltpu.MemorySpace.SMEM),
        ],
        out_specs=pl.BlockSpec((1, Cout, TM), lambda n, t: (n, 0, t)),
        compiler_params=pltpu.CompilerParams(
            dimension_semantics=("parallel", "parallel"),
            vmem_limit_bytes=32 * 1024 * 1024,
        ),
    )(cols, w_mat, bias2d, alpha2d)

    # ---- PixelShuffle (pure permutation; shared-scalar PReLU already applied) ----
    # conv_flat is exactly the NCHW conv output with spatial dims flattened.
    conv = conv_flat.reshape(N, Cout, H, W)
    y = conv.reshape(N, Cin, r, r, H, W)
    y = jnp.transpose(y, (0, 1, 4, 2, 5, 3))
    return y.reshape(N, Cin, H * r, W * r)                # NCHW


def _reference(x_nchw, weight_oihw, bias, alpha, up_scale):
    """Pure-JAX reference mirroring the PyTorch module semantics."""
    N, Cin, H, W = x_nchw.shape
    r = up_scale
    Cout = Cin * r * r
    conv = lax.conv_general_dilated(
        x_nchw, weight_oihw, window_strides=(1, 1), padding=((1, 1), (1, 1)),
        dimension_numbers=("NCHW", "OIHW", "NCHW"))
    conv = conv + bias.reshape(1, Cout, 1, 1)
    y = conv.reshape(N, Cin, r, r, H, W)
    y = jnp.transpose(y, (0, 1, 4, 2, 5, 3))
    y = y.reshape(N, Cin, H * r, W * r)
    return jnp.where(y > 0, y, alpha * y)


if __name__ == "__main__":
    key = jax.random.PRNGKey(0)
    k_x, k_w, k_b = jax.random.split(key, 3)

    N, Cin, H, W = 2, 4, 16, 16
    up_scale = 2
    Cout = Cin * up_scale ** 2

    x = jax.random.normal(k_x, (N, Cin, H, W), dtype=jnp.float32)
    # Deterministic, PyTorch-like init (kaiming-ish scale); not loaded from disk.
    fan_in = Cin * 3 * 3
    weight = jax.random.normal(k_w, (Cout, Cin, 3, 3), dtype=jnp.float32) / jnp.sqrt(fan_in)
    bias = jax.random.normal(k_b, (Cout,), dtype=jnp.float32) * 0.1
    alpha = jnp.float32(0.25)  # nn.PReLU() default init

    out = jax.block_until_ready(upsample_block(x, weight, bias, alpha, up_scale))
    assert out.shape == (N, Cin, H * up_scale, W * up_scale)

    # The kernel feeds the MXU bf16 operands (f32 accumulation).  Check tightly
    # against a reference fed the same bf16-rounded operands, and loosely against
    # the full-f32 reference.
    x_bf = x.astype(jnp.bfloat16).astype(jnp.float32)
    w_bf = weight.astype(jnp.bfloat16).astype(jnp.float32)
    ref_bf = _reference(x_bf, w_bf, bias, alpha, up_scale)
    ref_f32 = _reference(x, weight, bias, alpha, up_scale)
    assert jnp.allclose(out, ref_bf, atol=1e-4, rtol=1e-4), "mismatch vs bf16-rounded reference"
    assert jnp.allclose(out, ref_f32, atol=5e-2, rtol=5e-2), "mismatch vs f32 reference"

    print("KERNEL_OK")
</pallas_src>

<mosaic_0001>
module attributes {stable_mosaic.version = 11 : i64} {
  func.func @_conv_bias_prelu_kernel(%arg0: i32, %arg1: i32, %arg2: memref<1x128x128xbf16, #tpu.memory_space<vmem>>, %arg3: memref<16x128xbf16, #tpu.memory_space<vmem>>, %arg4: memref<16x1xf32, #tpu.memory_space<vmem>>, %arg5: memref<1x1xf32, #tpu.memory_space<smem>>, %arg6: memref<1x16x128xf32, #tpu.memory_space<vmem>>) attributes {dimension_semantics = [#tpu.dimension_semantics<parallel>, #tpu.dimension_semantics<parallel>], iteration_bounds = array<i64: 2, 2>, scalar_prefetch = 0 : i64, scratch_operands = 0 : i64, tpu.core_type = #tpu.core_type<tc>, window_params = [{transform_indices = @transform_0, window_bounds = array<i64: 1, 128, 128>}, {pipeline_mode = #tpu.pipeline_mode<synchronous>, transform_indices = @transform_1, window_bounds = array<i64: 16, 128>}, {pipeline_mode = #tpu.pipeline_mode<synchronous>, transform_indices = @transform_2, window_bounds = array<i64: 16, 1>}, {transform_indices = @transform_3, window_bounds = array<i64: 1, 1>}, {transform_indices = @transform_4, window_bounds = array<i64: 1, 16, 128>}]} {
    %c0 = arith.constant 0 : index
    %c0_0 = arith.constant 0 : index
    %0 = vector.load %arg3[%c0, %c0_0] : memref<16x128xbf16, #tpu.memory_space<vmem>>, vector<16x128xbf16>
    %c0_1 = arith.constant 0 : index
    %c0_2 = arith.constant 0 : index
    %c0_3 = arith.constant 0 : index
    %1 = vector.load %arg2[%c0_1, %c0_2, %c0_3] : memref<1x128x128xbf16, #tpu.memory_space<vmem>>, vector<1x128x128xbf16>
    %2 = vector.shape_cast %1 : vector<1x128x128xbf16> to vector<128x128xbf16>
    %cst = arith.constant dense<0.000000e+00> : vector<16x128xf32>
    %3 = tpu.matmul %0, %2, %cst {dimension_numbers = #tpu.dot_dimension_numbers<[1], [0], [0], [1], [0, 0, 1, 1], [], []>} : vector<16x128xbf16>, vector<128x128xbf16>, vector<16x128xf32> -> vector<16x128xf32>
    %c0_4 = arith.constant 0 : index
    %c0_5 = arith.constant 0 : index
    %4 = vector.load %arg4[%c0_4, %c0_5] : memref<16x1xf32, #tpu.memory_space<vmem>>, vector<16x1xf32>
    %5 = vector.broadcast %4 : vector<16x1xf32> to vector<16x128xf32>
    %6 = arith.addf %3, %5 : vector<16x128xf32>
    %c0_6 = arith.constant 0 : index
    %c0_7 = arith.constant 0 : index
    %7 = memref.load %arg5[%c0_6, %c0_7] : memref<1x1xf32, #tpu.memory_space<smem>>
    %cst_8 = arith.constant 0.000000e+00 : f32
    %8 = vector.broadcast %cst_8 : f32 to vector<16x128xf32>
    %9 = arith.cmpf ogt, %6, %8 : vector<16x128xf32>
    %10 = vector.broadcast %7 : f32 to vector<16x128xf32>
    %11 = arith.mulf %10, %6 : vector<16x128xf32>
    %12 = arith.select %9, %6, %11 : vector<16x128xi1>, vector<16x128xf32>
    %c0_9 = arith.constant 0 : index
    %c0_10 = arith.constant 0 : index
    %c0_11 = arith.constant 0 : index
    %13 = vector.load %arg6[%c0_9, %c0_10, %c0_11] : memref<1x16x128xf32, #tpu.memory_space<vmem>>, vector<1x16x128xf32>
    %14 = vector.shape_cast %13 : vector<1x16x128xf32> to vector<16x128xf32>
    %15 = vector.shape_cast %12 : vector<16x128xf32> to vector<1x16x128xf32>
    tpu.vector_store %arg6[%c0_9, %c0_10, %c0_11], %15 {strides = array<i32>} : memref<1x16x128xf32, #tpu.memory_space<vmem>>, vector<1x16x128xf32>,
    return
  }
  func.func @transform_0(%arg0: i32, %arg1: i32) -> (i32, i32, i32) {
    %c0_i32 = arith.constant 0 : i32
    %c0_i32_0 = arith.constant 0 : i32
    return %arg0, %c0_i32, %arg1 : i32, i32, i32
  }
  func.func @transform_1(%arg0: i32, %arg1: i32) -> (i32, i32) {
    %c0_i32 = arith.constant 0 : i32
    %c0_i32_0 = arith.constant 0 : i32
    %c0_i32_1 = arith.constant 0 : i32
    return %c0_i32, %c0_i32_0 : i32, i32
  }
  func.func @transform_2(%arg0: i32, %arg1: i32) -> (i32, i32) {
    %c0_i32 = arith.constant 0 : i32
    %c0_i32_0 = arith.constant 0 : i32
    %c0_i32_1 = arith.constant 0 : i32
    return %c0_i32, %c0_i32_0 : i32, i32
  }
  func.func @transform_3(%arg0: i32, %arg1: i32) -> (i32, i32) {
    %c0_i32 = arith.constant 0 : i32
    %c0_i32_0 = arith.constant 0 : i32
    %c0_i32_1 = arith.constant 0 : i32
    return %c0_i32, %c0_i32_0 : i32, i32
  }
  func.func @transform_4(%arg0: i32, %arg1: i32) -> (i32, i32, i32) {
    %c0_i32 = arith.constant 0 : i32
    %c0_i32_0 = arith.constant 0 : i32
    return %arg0, %c0_i32, %arg1 : i32, i32, i32
  }
}

</mosaic_0001>

<llo_original>
// kernel: tpu_custom_call.1
$region0: #{tpu_custom_call.1}
  #allocation0 [shape = 'u32[]', space=smem, size = 0x4, offset = 0x4, fixed_abs, tag = 'smem constant byte address 0x4 - core index']
  #allocation1 [shape = 'u32[144,128]{1,0:T(1,128)}', space=vmem, size = 0x12000, scoped, tag = 'internal scratch']
  #allocation2 [shape = 'f32[1,1]{1,0:T(1,128)S(6)}', space=smem, size = 0x200, scoped, tag = 'scoped memory for tpu_custom_call.1']
  %s0 = inlined_call_operand.hbm [shape: bf16[2,128,256], index: 0, kind: input, shape index: {}]
  %s1 = inlined_call_operand.vmem [shape: bf16[16,128], index: 1, kind: input, shape index: {}]
  %s2 = inlined_call_operand.vmem [shape: f32[16,1], index: 2, kind: input, shape index: {}]
  %s3 = inlined_call_operand.<no memory space> [shape: f32[1,1], index: 3, kind: input, shape index: {}]
  %s4 = inlined_call_operand.hbm [shape: f32[2,16,256], index: 4, kind: output, shape index: {}]
  %s5 = sld [smem:[#allocation0]]
  $region53: #{tpu_custom_call.1} parent=0
    _
  %s7 = ssub.s32 1, %s5
  %s8 = scalar_select 0, %s7, %s5
  %9 = sst [smem:[#allocation2]] %s3
  $region1: #{tpu_custom_call.1} parent=0
    #allocation3 [shape = 'u8[65536]{0}', space=vmem, size = 0x10000, scoped, tag = 'input window, operand 0']
    #allocation4 [shape = 's32[2]{0}', space=sflag, size = 0x8, scoped, tag = 'scoped memory for tpu_custom_call.1']
    #allocation5 [shape = 's32[2]{0}', space=sflag, size = 0x8, scoped, tag = 'scoped memory for tpu_custom_call.1']
    #allocation6 [shape = 'u8[16384]{0}', space=vmem, size = 0x4000, scoped, tag = 'output window, operand 0']
    %10 = vsyncpa [#allocation4], 0
    %s11 = scalar_lea.sflag [#allocation4], 1
    %12 = vsyncpa %s11, 0
    %13 = vsyncpa [#allocation5], 0
    %s14 = scalar_lea.sflag [#allocation5], 1
    %15 = vsyncpa %s14, 0
    loop: start=0, step=1, limit=6
    $region2: #{tpu_custom_call.1} parent=1 // loop_pre_header
      _
    $region3: #{tpu_custom_call.1} parent=1 // loop_header
      %s17 = sphi 0, %s21
      %p18 = scmp.ge.s32.totalorder %s17, 6
      %s24 = sphi 0, %s36
      %s25 = sphi 0, %s32
      %s26 = sphi 0, %s24
      %s27 = sphi 0, %s25
      %s28 = sphi 0, %s26
      %s29 = sphi 0, %s27
      %s41 = sphi 0, %s43
      %s44 = sphi 0, %s41
      %s45 = sphi 0, %s44
      %s61 = sphi 0, %s45
      %s65 = sphi 0, %s65
      %s67 = sphi 0, %s65
      %s68 = sphi 0, %s67
      %s82 = sphi 0, %s68
      %s86 = sphi 0, %s86
      %s88 = sphi 0, %s86
      %s89 = sphi 0, %s88
      %s103 = sphi 0, %s89
      %s107 = sphi 0, %s107
      %s109 = sphi 0, %s107
      %s110 = sphi 0, %s109
      %s124 = sphi 0, %s110
      %s132 = sphi 0, %s134
      %s135 = sphi 0, %s132
      %s136 = sphi 0, %s135
      %s152 = sphi 0, %s136
    $region4: #{tpu_custom_call.1} parent=1 // loop_header_branch
      %20 = sbr.rel (%p18) target = $region8
    $region5: #{tpu_custom_call.1} parent=1 // loop_body
      %s22 = ssub.s32 %s17, 1
      %s23 = ssub.s32 %s17, 2
      %s30 = sadd.s32 1, %s25
      %p31 = scmp.ge.s32.totalorder %s30, 2
      %s32 = scalar_select %p31, 0, %s30
      %s33 = sadd.s32 1, %s24
      %s34 = scalar_select %p31, %s33, %s24
      %p35 = scmp.ge.s32.totalorder %s34, 2
      %s36 = scalar_select %p35, 0, %s34
      %s37 = ssub.s32 %s24, %s36
      %s38 = ssub.s32 %s25, %s32
      %s39 = sor.u32 %s37, %s38
      %p40 = scmp.eq.s32.totalorder %s39, 0
      %s42 = sadd.s32 %s41, 1
      %s43 = scalar_select %p40, %s41, %s42
      %p46 = pneg %p40
      %p47 = scmp.eq.s32.totalorder %s17, 3
      %p48 = por %p46, %p47
      %p49 = scmp.ne.s32.totalorder %s41, %s44
      %p50 = scmp.eq.s32.totalorder %s17, 0
      %p51 = por %p49, %p50
      %p52 = scmp.ne.s32.totalorder %s41, %s44
      %p53 = scmp.eq.s32.totalorder %s22, 3
      %p54 = por %p52, %p53
      %p55 = scmp.ne.s32.totalorder %s44, %s45
      %p56 = scmp.eq.s32.totalorder %s22, 0
      %p57 = por %p55, %p56
      %p58 = scmp.ne.s32.totalorder %s44, %s45
      %p59 = scmp.eq.s32.totalorder %s23, 3
      %p60 = por %p58, %p59
      %p62 = scmp.ne.s32.totalorder %s45, %s61
      %p63 = scmp.eq.s32.totalorder %s23, 0
      %p64 = por %p62, %p63
      %s66 = sadd.s32 %s65, 1
      %p69 = scmp.eq.s32.totalorder %s17, 3
      %p70 = scmp.ne.s32.totalorder %s65, %s67
      %p71 = scmp.eq.s32.totalorder %s17, 0
      %p72 = por %p70, %p71
      %p73 = scmp.ne.s32.totalorder %s65, %s67
      %p74 = scmp.eq.s32.totalorder %s22, 3
      %p75 = por %p73, %p74
      %p76 = scmp.ne.s32.totalorder %s67, %s68
      %p77 = scmp.eq.s32.totalorder %s22, 0
      %p78 = por %p76, %p77
      %p79 = scmp.ne.s32.totalorder %s67, %s68
      %p80 = scmp.eq.s32.totalorder %s23, 3
      %p81 = por %p79, %p80
      %p83 = scmp.ne.s32.totalorder %s68, %s82
      %p84 = scmp.eq.s32.totalorder %s23, 0
      %p85 = por %p83, %p84
      %s87 = sadd.s32 %s86, 1
      %p90 = scmp.eq.s32.totalorder %s17, 3
      %p91 = scmp.ne.s32.totalorder %s86, %s88
      %p92 = scmp.eq.s32.totalorder %s17, 0
      %p93 = por %p91, %p92
      %p94 = scmp.ne.s32.totalorder %s86, %s88
      %p95 = scmp.eq.s32.totalorder %s22, 3
      %p96 = por %p94, %p95
      %p97 = scmp.ne.s32.totalorder %s88, %s89
      %p98 = scmp.eq.s32.totalorder %s22, 0
      %p99 = por %p97, %p98
      %p100 = scmp.ne.s32.totalorder %s88, %s89
      %p101 = scmp.eq.s32.totalorder %s23, 3
      %p102 = por %p100, %p101
      %p104 = scmp.ne.s32.totalorder %s89, %s103
      %p105 = scmp.eq.s32.totalorder %s23, 0
      %p106 = por %p104, %p105
      %s108 = sadd.s32 %s107, 1
      %p111 = scmp.eq.s32.totalorder %s17, 3
      %p112 = scmp.ne.s32.totalorder %s107, %s109
      %p113 = scmp.eq.s32.totalorder %s17, 0
      %p114 = por %p112, %p113
      %p115 = scmp.ne.s32.totalorder %s107, %s109
      %p116 = scmp.eq.s32.totalorder %s22, 3
      %p117 = por %p115, %p116
      %p118 = scmp.ne.s32.totalorder %s109, %s110
      %p119 = scmp.eq.s32.totalorder %s22, 0
      %p120 = por %p118, %p119
      %p121 = scmp.ne.s32.totalorder %s109, %s110
      %p122 = scmp.eq.s32.totalorder %s23, 3
      %p123 = por %p121, %p122
      %p125 = scmp.ne.s32.totalorder %s110, %s124
      %p126 = scmp.eq.s32.totalorder %s23, 0
      %p127 = por %p125, %p126
      %s128 = ssub.s32 %s24, %s36
      %s129 = ssub.s32 %s25, %s32
      %s130 = sor.u32 %s128, %s129
      %p131 = scmp.eq.s32.totalorder %s130, 0
      %s133 = sadd.s32 %s132, 1
      %s134 = scalar_select %p131, %s132, %s133
      %p137 = pneg %p131
      %p138 = scmp.eq.s32.totalorder %s17, 3
      %p139 = por %p137, %p138
      %p140 = scmp.ne.s32.totalorder %s132, %s135
      %p141 = scmp.eq.s32.totalorder %s17, 0
      %p142 = por %p140, %p141
      %p143 = scmp.ne.s32.totalorder %s132, %s135
      %p144 = scmp.eq.s32.totalorder %s22, 3
      %p145 = por %p143, %p144
      %p146 = scmp.ne.s32.totalorder %s135, %s136
      %p147 = scmp.eq.s32.totalorder %s22, 0
      %p148 = por %p146, %p147
      %p149 = scmp.ne.s32.totalorder %s135, %s136
      %p150 = scmp.eq.s32.totalorder %s23, 3
      %p151 = por %p149, %p150
      %p153 = scmp.ne.s32.totalorder %s136, %s152
      %p154 = scmp.eq.s32.totalorder %s23, 0
      %p155 = por %p153, %p154
      %p156 = scmp.le.s32.totalorder 1, %s17
      %p157 = scmp.lt.s32.totalorder %s17, 5
      %p158 = pnand %p156, %p157
      %p159 = pneg %p158
      // Predicated region
      $region9: #{tpu_custom_call.1} parent=5 // pred_check
        _
      $region10: #{tpu_custom_call.1} parent=5 // pred_check_branch
        %161 = sbr.rel (%p158) target = $region12
      $region11: #{tpu_custom_call.1} parent=5 // pred_region
        %s162 = ssub.s32 %s17, 1
        // Predicated region
        $region13: #{tpu_custom_call.1} parent=11 // pred_check
          %p163 = pneg %p78
        $region14: #{tpu_custom_call.1} parent=11 // pred_check_branch
          %165 = sbr.rel (%p163) target = $region16
        $region15: #{tpu_custom_call.1} parent=11 // pred_region
          _
        $region16: #{tpu_custom_call.1} parent=11 // pred_fallthru
          _
        // Predicated region
        $region17: #{tpu_custom_call.1} parent=11 // pred_check
          %p166 = pneg %p99
        $region18: #{tpu_custom_call.1} parent=11 // pred_check_branch
          %168 = sbr.rel (%p166) target = $region20
        $region19: #{tpu_custom_call.1} parent=11 // pred_region
          _
        $region20: #{tpu_custom_call.1} parent=11 // pred_fallthru
          _
        // Predicated region
        $region21: #{tpu_custom_call.1} parent=11 // pred_check
          %p169 = pneg %p120
        $region22: #{tpu_custom_call.1} parent=11 // pred_check_branch
          %171 = sbr.rel (%p169) target = $region24
        $region23: #{tpu_custom_call.1} parent=11 // pred_region
          _
        $region24: #{tpu_custom_call.1} parent=11 // pred_fallthru
          _
      $region12: #{tpu_custom_call.1} parent=5 // pred_fallthru
        _
      %p172 = scmp.lt.s32.totalorder %s17, 4
      // Predicated region
      $region25: #{tpu_custom_call.1} parent=5 // pred_check
        %p173 = pneg %p172
      $region26: #{tpu_custom_call.1} parent=5 // pred_check_branch
        %175 = sbr.rel (%p173) target = $region28
      $region27: #{tpu_custom_call.1} parent=5 // pred_region
        // Predicated region
        $region29: #{tpu_custom_call.1} parent=27 // pred_check
          %p176 = pneg %p51
        $region30: #{tpu_custom_call.1} parent=27 // pred_check_branch
          %178 = sbr.rel (%p176) target = $region32
        $region31: #{tpu_custom_call.1} parent=27 // pred_region
          %s179 = sand.u32 %s41, 1
          %s180 = scalar_lea.sflag [#allocation4], %s179
          %s181 = sand.u32 %s41, 1
          %s182 = smul.addr %s181, 64
          %s183 = scalar_lea.vmem [#allocation3], %s182
          %s185 = ssub.s32 1024, 1024
          %186 = vsyncadd %s180, %s185
          %s187 = smul.addr %s24, 32
          %s188 = sadd.s32 %s25, %s187
          %s189 = smul.addr %s188, 64
          %s190 = scalar_lea.hbm %s0, %s189
          %s191 = sshll.u32 %s183, 4
          %s192 = int_to_ptr.vmem [resolvable:$true] %s191
          %197 = dma.hbm_to_vmem [thread:$0]  %s190, 1024, %s192, %s180, 128, 64, 4
        $region32: #{tpu_custom_call.1} parent=27 // pred_fallthru
          _
      $region28: #{tpu_custom_call.1} parent=5 // pred_fallthru
        _
      %p198 = scmp.le.s32.totalorder 1, %s17
      %p199 = scmp.lt.s32.totalorder %s17, 5
      %p200 = pnand %p198, %p199
      %p201 = pneg %p200
      // Predicated region
      $region33: #{tpu_custom_call.1} parent=5 // pred_check
        _
      $region34: #{tpu_custom_call.1} parent=5 // pred_check_branch
        %203 = sbr.rel (%p200) target = $region36
      $region35: #{tpu_custom_call.1} parent=5 // pred_region
        %s204 = ssub.s32 %s17, 1
        %s205 = sand.u32 %s44, 1
        %s206 = scalar_lea.sflag [#allocation4], %s205
        %s207 = sand.u32 %s44, 1
        %s208 = smul.addr %s207, 64
        %s209 = scalar_lea.vmem [#allocation3], %s208
        // Predicated region
        $region37: #{tpu_custom_call.1} parent=35 // pred_check
          %p210 = pneg %p57
        $region38: #{tpu_custom_call.1} parent=35 // pred_check_branch
          %212 = sbr.rel (%p210) target = $region40
        $region39: #{tpu_custom_call.1} parent=35 // pred_region
          %213 = dma.done %s206, 1024
        $region40: #{tpu_custom_call.1} parent=35 // pred_fallthru
          _
        %s214 = sand.u32 %s44, 1
        %s215 = scalar_lea.sflag [#allocation4], %s214
        %s216 = sand.u32 %s44, 1
        %s217 = smul.addr %s216, 64
        %s218 = scalar_lea.vmem [#allocation3], %s217
        %p219 = pneg %p57
        %p220 = pneg %p54
        %p221 = pneg %p78
        %p222 = pneg %p75
        %p223 = pneg %p99
        %p224 = pneg %p96
        %p225 = pneg %p120
        %p226 = pneg %p117
        %p227 = pneg %p148
        %p228 = pneg %p145
        %s229 = sand.u32 %s135, 1
        %s230 = scalar_lea.sflag [#allocation5], %s229
        %s231 = sand.u32 %s135, 1
        %s232 = smul.addr %s231, 16
        %s233 = scalar_lea.vmem [#allocation6], %s232
        %v235 = vld [vmem:[%s1] sm:$0xf]
        %v236 = vld [vmem:[%s1 + $0x4] sm:$0xf]
        %v237 = vld [vmem:[%s209] sm:$0xf]
        %v238 = vld [vmem:[%s209 + $0x4] sm:$0xf]
        %v239 = vld [vmem:[%s209 + $0x8] sm:$0xf]
        %v240 = vld [vmem:[%s209 + $0xc] sm:$0xf]
        %v241 = vld [vmem:[%s209 + $0x10] sm:$0xf]
        %v242 = vld [vmem:[%s209 + $0x14] sm:$0xf]
        %v243 = vld [vmem:[%s209 + $0x18] sm:$0xf]
        %v244 = vld [vmem:[%s209 + $0x1c] sm:$0xf]
        %v245 = vld [vmem:[%s209 + $0x20] sm:$0xf]
        %v246 = vld [vmem:[%s209 + $0x24] sm:$0xf]
        %v247 = vld [vmem:[%s209 + $0x28] sm:$0xf]
        %v248 = vld [vmem:[%s209 + $0x2c] sm:$0xf]
        %v249 = vld [vmem:[%s209 + $0x30] sm:$0xf]
        %v250 = vld [vmem:[%s209 + $0x34] sm:$0xf]
        %v251 = vld [vmem:[%s209 + $0x38] sm:$0xf]
        %v252 = vld [vmem:[%s209 + $0x3c] sm:$0xf]
        %v253 = vld [vmem:[%s2] sm:$0xff]
        %v254 = vld [vmem:[%s2 + $0x8] sm:$0xff]
        %256 = vset.pattern.permute.xlu0 0
        %257 = vperm.xlu0 %256, %v253
        %v258 = vpop.permute.xlu0 %257
        %261 = vset.pattern.permute.xlu0 0
        %262 = vperm.xlu0 %261, %v254
        %v263 = vpop.permute.xlu0 %262
        %v267 = vunpack.c.l.b16 %v235
        %v268 = vunpack.c.l.b16 %v236
        %v269 = vpack.c.b16 %v268, %v267
        %v287 = vunpack.c.l.b16 %v237
        %v288 = vunpack.c.l.b16 %v238
        %v289 = vunpack.c.l.b16 %v239
        %v290 = vunpack.c.l.b16 %v240
        %v291 = vunpack.c.l.b16 %v241
        %v292 = vunpack.c.l.b16 %v242
        %v293 = vunpack.c.l.b16 %v243
        %v294 = vunpack.c.l.b16 %v244
        %v295 = vunpack.c.l.b16 %v245
        %v296 = vunpack.c.l.b16 %v246
        %v297 = vunpack.c.l.b16 %v247
        %v298 = vunpack.c.l.b16 %v248
        %v299 = vunpack.c.l.b16 %v249
        %v300 = vunpack.c.l.b16 %v250
        %v301 = vunpack.c.l.b16 %v251
        %v302 = vunpack.c.l.b16 %v252
        %v303 = vpack.c.b16 %v288, %v287
        %v304 = vpack.c.b16 %v290, %v289
        %v305 = vpack.c.b16 %v292, %v291
        %v306 = vpack.c.b16 %v294, %v293
        %v307 = vpack.c.b16 %v296, %v295
        %v308 = vpack.c.b16 %v298, %v297
        %v309 = vpack.c.b16 %v300, %v299
        %v310 = vpack.c.b16 %v302, %v301
        %319 = vmatprep.subr.bf16.mxu0 0
        %320 = vmatpush1.bf16.msra.mxu0 %v303
        %321 = vmatprep.subr.bf16.mxu0 0
        %322 = vmatpush1.bf16.msra.mxu0 %v304
        %323 = vmatprep.subr.bf16.mxu0 0
        %324 = vmatpush1.bf16.msra.mxu0 %v305
        %325 = vmatprep.subr.bf16.mxu0 0
        %326 = vmatpush1.bf16.msra.mxu0 %v306
        %327 = vmatprep.subr.bf16.mxu0 0
        %328 = vmatpush1.bf16.msra.mxu0 %v307
        %329 = vmatprep.subr.bf16.mxu0 0
        %330 = vmatpush1.bf16.msra.mxu0 %v308
        %331 = vmatprep.subr.bf16.mxu0 0
        %332 = vmatpush1.bf16.msra.mxu0 %v309
        %333 = vmatprep.subr.bf16.mxu0 0
        %334 = vmatpush1.bf16.msra.mxu0 %v310
        %335 = vmatprep.subr.bf16.mxu0 0
        %336 = vmatpush1.bf16.msra.mxu0 0
        %337 = vmatprep.subr.bf16.mxu0 0
        %338 = vmatpush1.bf16.msra.mxu0 0
        %339 = vmatprep.subr.bf16.mxu0 0
        %340 = vmatpush1.bf16.msra.mxu0 0
        %341 = vmatprep.subr.bf16.mxu0 0
        %342 = vmatpush1.bf16.msra.mxu0 0
        %343 = vmatprep.subr.bf16.mxu0 0
        %344 = vmatpush1.bf16.msra.mxu0 0
        %345 = vmatprep.subr.bf16.mxu0 0
        %346 = vmatpush1.bf16.msra.mxu0 0
        %347 = vmatprep.subr.bf16.mxu0 0
        %348 = vmatpush1.bf16.msra.mxu0 0
        %349 = vmatprep.subr.bf16.mxu0 0
        %350 = vmatpush1.bf16.msra.mxu0 0
        %351 = vmatprep.mubr.bf16.mxu0 0
        %352 = vmatmul.mubr.bf16.gmra.mrb[0].mxu0 %v269
        %v353 = vpop.f32.mrb[0].mxu0
        %v354 = vadd.f32 %v258, %v353
        %v355 = vpop.f32.mrb[0].mxu0
        %v356 = vpop.f32.mrb[0].mxu0
        %v357 = vadd.f32 %v263, %v356
        %v358 = vpop.f32.mrb[0].mxu0
        %359 = vdwg.mxu0
        %s360 = sld [smem:[#allocation2]]
        %vm361 = vcmp.gt.f32.partialorder %v354, 0.0
        %vm362 = vcmp.gt.f32.partialorder %v357, 0.0
        %v363 = vstv %s360
        %v364 = vmul.f32 %v363, %v354
        %v365 = vmul.f32 %v363, %v357
        %v366 = vsel %vm361, %v354, %v364
        %v367 = vsel %vm362, %v357, %v365
        %368 = vst [vmem:[%s233] sm:$0xff] %v366
        %369 = vst [vmem:[%s233 + $0x8] sm:$0xff] %v367
        %s370 = sand.u32 %s135, 1
        %s371 = scalar_lea.sflag [#allocation5], %s370
        %s372 = sand.u32 %s135, 1
        %s373 = smul.addr %s372, 16
        %s374 = scalar_lea.vmem [#allocation6], %s373
        // Predicated region
        $region41: #{tpu_custom_call.1} parent=35 // pred_check
          %p375 = pneg %p145
        $region42: #{tpu_custom_call.1} parent=35 // pred_check_branch
          %377 = sbr.rel (%p375) target = $region44
        $region43: #{tpu_custom_call.1} parent=35 // pred_region
          %s379 = ssub.s32 256, 256
          %380 = vsyncadd %s371, %s379
          %s381 = smul.addr %s26, 4
          %s382 = sadd.s32 %s27, %s381
          %s383 = smul.addr %s382, 128
          %s384 = scalar_lea.hbm %s4, %s383
          %s385 = sshll.u32 %s374, 4
          %s386 = int_to_ptr.vmem [resolvable:$true] %s385
          %391 = dma.vmem_to_hbm [thread:$0]  %s386, 256, %s384, %s371, 128, 256, 8
        $region44: #{tpu_custom_call.1} parent=35 // pred_fallthru
          _
      $region36: #{tpu_custom_call.1} parent=5 // pred_fallthru
        _
      %p392 = scmp.le.s32.totalorder 2, %s17
      // Predicated region
      $region45: #{tpu_custom_call.1} parent=5 // pred_check
        %p393 = pneg %p392
      $region46: #{tpu_custom_call.1} parent=5 // pred_check_branch
        %395 = sbr.rel (%p393) target = $region48
      $region47: #{tpu_custom_call.1} parent=5 // pred_region
        %s396 = ssub.s32 %s17, 2
        // Predicated region
        $region49: #{tpu_custom_call.1} parent=47 // pred_check
          %p397 = pneg %p151
        $region50: #{tpu_custom_call.1} parent=47 // pred_check_branch
          %399 = sbr.rel (%p397) target = $region52
        $region51: #{tpu_custom_call.1} parent=47 // pred_region
          %s400 = sand.u32 %s136, 1
          %s401 = scalar_lea.sflag [#allocation5], %s400
          %s402 = sand.u32 %s136, 1
          %s403 = smul.addr %s402, 16
          %s404 = scalar_lea.vmem [#allocation6], %s403
          %405 = dma.done %s401, 256
        $region52: #{tpu_custom_call.1} parent=47 // pred_fallthru
          _
      $region48: #{tpu_custom_call.1} parent=5 // pred_fallthru
        _
    $region6: #{tpu_custom_call.1} parent=1 // loop_footer
      %s21 = sadd.s32 1, %s17
    $region7: #{tpu_custom_call.1} parent=1 // loop_footer_branch
      %16 = sbr.rel target = $region3
    $region8: #{tpu_custom_call.1} parent=1 // loop_exit
      _
    %406 = vsyncpa [#allocation4], 1
    %s407 = scalar_lea.sflag [#allocation4], 1
    %408 = vsyncpa %s407, 1
    %409 = vsyncpa [#allocation5], 1
    %s410 = scalar_lea.sflag [#allocation5], 1
    %411 = vsyncpa %s410, 1

</llo_original>
